<compile_context>
chip_gen: v6e
topology: v6e:2x2x1
jax: 0.10.0
libtpu: 0.0.40
codegen_flags: <defaults>
</compile_context>

<pallas_src>
import functools

import jax
import jax.numpy as jnp
from jax.experimental import pallas as pl
from jax.experimental.pallas import tpu as pltpu


# ----------------------------------------------------------------------------------
# Pallas kernel: full forward pass (GRU recurrence -> softmax -> weighted C @ z)
# ----------------------------------------------------------------------------------
def _obs_ensemble_kernel(
    x_ref,        # (T*B, D)   time-major GRU input rows (row = t*B + b)
    wih_ref,      # (D, 3H)    gate-fused input->hidden weights (r|z|n), x @ W layout
    gib_ref,      # (1, 3H)    folded bias: [b_ir+b_hr, b_iz+b_hz, b_in]
    whh_ref,      # (H, 3H)    gate-fused hidden->hidden weights, h @ W layout
    ghb_ref,      # (1, 3H)    per-step hidden bias: [0, 0, b_hn]
    cs_ref,       # (N, K*P)   Cs rearranged so (z @ cs)[b, k*P+p] = (Cs[k] @ z[b])[p]
    z_ref,        # (B, N)     current latent state
    y_ref,        # (B, P)     output observation
):
    B = z_ref.shape[0]
    T = x_ref.shape[0] // B
    H = whh_ref.shape[0]          # == num_submodels K
    G = whh_ref.shape[1]          # == 3H
    P = y_ref.shape[1]

    # (1) Input projection for ALL timesteps in one MXU matmul (hoisted out of the
    #     serial recurrence); input + r/z hidden biases pre-folded into gib.
    gi_all = jnp.dot(x_ref[...], wih_ref[...],
                     preferred_element_type=jnp.float32) + gib_ref[...]      # (T*B, 3H)

    # (2) Cz[b, k*P+p] = (Cs[k] @ z[b])[p]; independent of the recurrence, issue it up
    #     front so it hides under the serial GRU loop.
    cz = jnp.dot(z_ref[...], cs_ref[...], preferred_element_type=jnp.float32)  # (B, K*P)

    whh = whh_ref[...]                                    # (H, 3H)
    gh0 = jnp.broadcast_to(ghb_ref[...], (B, G))          # hoisted bias broadcast (n-gate only)

    # (3) Serial GRU recurrence, fully unrolled (T is static and small).  The hidden
    #     projection is a K-term VPU FMA chain: with H = K tiny, this avoids MXU
    #     push/pop round-trips on the serial dependence path entirely.
    h = jnp.zeros((B, H), jnp.float32)
    for t in range(T):
        gi = gi_all[t * B:(t + 1) * B, :]                 # (B, 3H), static slice
        gh = gh0
        for k in range(H):
            gh = gh + h[:, k:k + 1] * whh[k:k + 1, :]     # broadcast-multiply-add on VPU
        r = jax.nn.sigmoid(gi[:, 0:H] + gh[:, 0:H])
        u = jax.nn.sigmoid(gi[:, H:2 * H] + gh[:, H:2 * H])
        n = jnp.tanh(gi[:, 2 * H:3 * H] + r * gh[:, 2 * H:3 * H])
        h = (1.0 - u) * n + u * h

    # (4) softmax over submodels -> alpha: (B, K)
    e = jnp.exp(h - jnp.max(h, axis=-1, keepdims=True))
    alpha = e * pl.reciprocal(jnp.sum(e, axis=-1, keepdims=True), approx=True)

    # (5) y[b, :] = sum_k alpha[b, k] * Cz[b, k*P:(k+1)*P]   (static lane slices, VPU only)
    y = alpha[:, 0:1] * cz[:, 0:P]
    for k in range(1, H):
        y = y + alpha[:, k:k + 1] * cz[:, k * P:(k + 1) * P]
    y_ref[...] = y.astype(y_ref.dtype)


# ----------------------------------------------------------------------------------
# Wrapper: parameter reshaping / gate fusion + pallas_call
# ----------------------------------------------------------------------------------
@functools.partial(jax.jit, static_argnames=())
def _obs_ensemble_forward_impl(z, rnn_input, params):
    z = z.astype(jnp.float32)
    rnn_input = rnn_input.astype(jnp.float32)

    Cs = params["Cs"].astype(jnp.float32)                 # (K, P, N)
    K, P, N = Cs.shape
    T, B, D = rnn_input.shape
    H = K                                                 # GRU hidden size == num_submodels

    # PyTorch GRU layout: weight_ih (3H, D), weight_hh (3H, H), gate order (r, z, n).
    W_ih = params["weight_ih_l0"].astype(jnp.float32)
    W_hh = params["weight_hh_l0"].astype(jnp.float32)
    b_ih = params["bias_ih_l0"].astype(jnp.float32)
    b_hh = params["bias_hh_l0"].astype(jnp.float32)

    wih_all = W_ih.T                                      # (D, 3H), x @ W layout
    whh_all = W_hh.T                                      # (H, 3H), h @ W layout
    # Bias folding: r/z hidden biases merge into the hoisted input projection; the n-gate
    # hidden bias must stay in the recurrence (it sits under the r*(...) factor).
    gi_bias = jnp.concatenate(
        [b_ih[0:H] + b_hh[0:H], b_ih[H:2 * H] + b_hh[H:2 * H], b_ih[2 * H:3 * H]])[None]
    gh_bias = jnp.concatenate(
        [jnp.zeros((2 * H,), jnp.float32), b_hh[2 * H:3 * H]])[None]

    # Cs rearranged so cz = z @ cs_nkp gives cz[b, k*P+p] = (Cs[k] @ z[b])[p].
    cs_nkp = jnp.transpose(Cs, (2, 0, 1)).reshape(N, K * P)

    x_all = rnn_input.reshape(T * B, D)                   # time-major rows: row = t*B + b

    # TODO(synk): if T or B grow large in production, stream y_hist over an "arbitrary"
    # T-chunk grid (carry h in VMEM scratch, pl.when-init at chunk 0) and shard B across
    # cores with dimension_semantics=("parallel",); whole-array VMEM residency is fine at
    # these shapes.
    vmem = pl.BlockSpec(memory_space=pltpu.MemorySpace.VMEM)
    y = pl.pallas_call(
        _obs_ensemble_kernel,
        out_shape=jax.ShapeDtypeStruct((B, P), jnp.float32),
        in_specs=[vmem] * 7,
        out_specs=vmem,
    )(x_all, wih_all, gi_bias, whh_all, gh_bias, cs_nkp, z)
    return y


def obs_ensemble_forward(z, y_hist, params, cond=None):
    """ObsEnsemble.forward.

    z:      (B, n)       latent state
    y_hist: (T, B, p)    past observation sequence
    cond:   optional (B, C) conditional context (concatenated to each timestep)
    """
    y_hist = y_hist.astype(jnp.float32)
    if cond is not None:
        cond = cond.astype(jnp.float32)
        if cond.ndim > 2:
            cond = cond[0]
        T = y_hist.shape[0]
        rnn_input = jnp.concatenate(
            [y_hist, jnp.broadcast_to(cond[None], (T,) + cond.shape)], axis=-1)
    else:
        rnn_input = y_hist
    return _obs_ensemble_forward_impl(z, rnn_input, params)


# ----------------------------------------------------------------------------------
# Pure-JAX reference (mirrors the PyTorch semantics) for validation
# ----------------------------------------------------------------------------------
def obs_ensemble_reference(z, y_hist, params, cond=None):
    if cond is not None:
        if cond.ndim > 2:
            cond = cond[0]
        T = y_hist.shape[0]
        rnn_input = jnp.concatenate(
            [y_hist, jnp.broadcast_to(cond[None], (T,) + cond.shape)], axis=-1)
    else:
        rnn_input = y_hist

    Cs = params["Cs"]
    K = Cs.shape[0]
    H = K
    W_ih, W_hh = params["weight_ih_l0"], params["weight_hh_l0"]
    b_ih, b_hh = params["bias_ih_l0"], params["bias_hh_l0"]

    B = z.shape[0]
    h = jnp.zeros((B, H), jnp.float32)
    for t in range(rnn_input.shape[0]):
        x = rnn_input[t]
        gi = x @ W_ih.T + b_ih
        gh = h @ W_hh.T + b_hh
        r = jax.nn.sigmoid(gi[:, 0 * H:1 * H] + gh[:, 0 * H:1 * H])
        u = jax.nn.sigmoid(gi[:, 1 * H:2 * H] + gh[:, 1 * H:2 * H])
        n = jnp.tanh(gi[:, 2 * H:3 * H] + r * gh[:, 2 * H:3 * H])
        h = (1.0 - u) * n + u * h

    alpha = jax.nn.softmax(h, axis=-1)                              # (B, K)
    Ct = jnp.sum(Cs[None] * alpha[..., None, None], axis=1)         # (B, P, N)
    return jnp.einsum("bpn,bn->bp", Ct, z)


# ----------------------------------------------------------------------------------
if __name__ == "__main__":
    # Small shapes consistent with the module's forward signature.
    num_submodels = 4   # K (== GRU hidden size)
    latent_dim = 8      # n
    obs_dim = 6         # p
    B = 2
    T = 7               # length of y_hist
    D = obs_dim         # cond=None -> GRU input dim == obs_dim

    key = jax.random.PRNGKey(0)
    k = jax.random.split(key, 8)

    params = {
        "Cs":           jax.random.normal(k[0], (num_submodels, obs_dim, latent_dim), jnp.float32),
        "weight_ih_l0": 0.3 * jax.random.normal(k[1], (3 * num_submodels, D), jnp.float32),
        "weight_hh_l0": 0.3 * jax.random.normal(k[2], (3 * num_submodels, num_submodels), jnp.float32),
        "bias_ih_l0":   0.1 * jax.random.normal(k[3], (3 * num_submodels,), jnp.float32),
        "bias_hh_l0":   0.1 * jax.random.normal(k[4], (3 * num_submodels,), jnp.float32),
    }

    z = jax.random.normal(k[5], (B, latent_dim), jnp.float32)
    y_hist = jax.random.normal(k[6], (T, B, obs_dim), jnp.float32)

    y_kernel = obs_ensemble_forward(z, y_hist, params)
    jax.block_until_ready(y_kernel)

    y_ref = obs_ensemble_reference(z, y_hist, params)
    assert y_kernel.shape == (B, obs_dim)
    # Tolerance is 2e-3 because the softmax denominator uses the EUP approximate
    # reciprocal (alpha rows sum to 1 only to ~1e-3 relative accuracy).
    assert jnp.allclose(y_kernel, y_ref, rtol=2e-3, atol=2e-3), (y_kernel, y_ref)

    print("KERNEL_OK")
</pallas_src>

<mosaic_0001>
module attributes {stable_mosaic.version = 11 : i64} {
  func.func @_obs_ensemble_kernel(%arg0: memref<14x6xf32, #tpu.memory_space<vmem>>, %arg1: memref<6x12xf32, #tpu.memory_space<vmem>>, %arg2: memref<1x12xf32, #tpu.memory_space<vmem>>, %arg3: memref<4x12xf32, #tpu.memory_space<vmem>>, %arg4: memref<1x12xf32, #tpu.memory_space<vmem>>, %arg5: memref<8x24xf32, #tpu.memory_space<vmem>>, %arg6: memref<2x8xf32, #tpu.memory_space<vmem>>, %arg7: memref<2x6xf32, #tpu.memory_space<vmem>>) attributes {dimension_semantics = [], scalar_prefetch = 0 : i64, scratch_operands = 0 : i64, tpu.core_type = #tpu.core_type<tc>} {
    %c0 = arith.constant 0 : index
    %c0_0 = arith.constant 0 : index
    %0 = vector.load %arg0[%c0, %c0_0] : memref<14x6xf32, #tpu.memory_space<vmem>>, vector<14x6xf32>
    %c0_1 = arith.constant 0 : index
    %c0_2 = arith.constant 0 : index
    %1 = vector.load %arg1[%c0_1, %c0_2] : memref<6x12xf32, #tpu.memory_space<vmem>>, vector<6x12xf32>
    %cst = arith.constant dense<0.000000e+00> : vector<14x12xf32>
    %2 = tpu.matmul %0, %1, %cst {dimension_numbers = #tpu.dot_dimension_numbers<[1], [0], [0], [1], [0, 0, 1, 1], [], []>} : vector<14x6xf32>, vector<6x12xf32>, vector<14x12xf32> -> vector<14x12xf32>
    %c0_3 = arith.constant 0 : index
    %c0_4 = arith.constant 0 : index
    %3 = vector.load %arg2[%c0_3, %c0_4] : memref<1x12xf32, #tpu.memory_space<vmem>>, vector<1x12xf32>
    %4 = vector.broadcast %3 : vector<1x12xf32> to vector<14x12xf32>
    %5 = arith.addf %2, %4 : vector<14x12xf32>
    %c0_5 = arith.constant 0 : index
    %c0_6 = arith.constant 0 : index
    %6 = vector.load %arg6[%c0_5, %c0_6] : memref<2x8xf32, #tpu.memory_space<vmem>>, vector<2x8xf32>
    %c0_7 = arith.constant 0 : index
    %c0_8 = arith.constant 0 : index
    %7 = vector.load %arg5[%c0_7, %c0_8] : memref<8x24xf32, #tpu.memory_space<vmem>>, vector<8x24xf32>
    %cst_9 = arith.constant dense<0.000000e+00> : vector<2x24xf32>
    %8 = tpu.matmul %6, %7, %cst_9 {dimension_numbers = #tpu.dot_dimension_numbers<[1], [0], [0], [1], [0, 0, 1, 1], [], []>} : vector<2x8xf32>, vector<8x24xf32>, vector<2x24xf32> -> vector<2x24xf32>
    %c0_10 = arith.constant 0 : index
    %c0_11 = arith.constant 0 : index
    %9 = vector.load %arg3[%c0_10, %c0_11] : memref<4x12xf32, #tpu.memory_space<vmem>>, vector<4x12xf32>
    %c0_12 = arith.constant 0 : index
    %c0_13 = arith.constant 0 : index
    %10 = vector.load %arg4[%c0_12, %c0_13] : memref<1x12xf32, #tpu.memory_space<vmem>>, vector<1x12xf32>
    %11 = vector.shape_cast %10 : vector<1x12xf32> to vector<1x12xf32>
    %12 = vector.broadcast %11 : vector<1x12xf32> to vector<2x12xf32>
    %cst_14 = arith.constant 0.000000e+00 : f32
    %13 = vector.broadcast %cst_14 : f32 to vector<2x4xf32>
    %14 = vector.extract_strided_slice %5 {offsets = [0, 0], sizes = [2, 12], strides = [1, 1]} : vector<14x12xf32> to vector<2x12xf32>
    %15 = vector.extract_strided_slice %13 {offsets = [0, 0], sizes = [2, 1], strides = [1, 1]} : vector<2x4xf32> to vector<2x1xf32>
    %16 = vector.extract_strided_slice %9 {offsets = [0, 0], sizes = [1, 12], strides = [1, 1]} : vector<4x12xf32> to vector<1x12xf32>
    %17 = vector.broadcast %15 : vector<2x1xf32> to vector<2x12xf32>
    %18 = vector.broadcast %16 : vector<1x12xf32> to vector<2x12xf32>
    %19 = arith.mulf %17, %18 : vector<2x12xf32>
    %20 = arith.addf %12, %19 : vector<2x12xf32>
    %21 = vector.extract_strided_slice %13 {offsets = [0, 1], sizes = [2, 1], strides = [1, 1]} : vector<2x4xf32> to vector<2x1xf32>
    %22 = vector.extract_strided_slice %9 {offsets = [1, 0], sizes = [1, 12], strides = [1, 1]} : vector<4x12xf32> to vector<1x12xf32>
    %23 = vector.broadcast %21 : vector<2x1xf32> to vector<2x12xf32>
    %24 = vector.broadcast %22 : vector<1x12xf32> to vector<2x12xf32>
    %25 = arith.mulf %23, %24 : vector<2x12xf32>
    %26 = arith.addf %20, %25 : vector<2x12xf32>
    %27 = vector.extract_strided_slice %13 {offsets = [0, 2], sizes = [2, 1], strides = [1, 1]} : vector<2x4xf32> to vector<2x1xf32>
    %28 = vector.extract_strided_slice %9 {offsets = [2, 0], sizes = [1, 12], strides = [1, 1]} : vector<4x12xf32> to vector<1x12xf32>
    %29 = vector.broadcast %27 : vector<2x1xf32> to vector<2x12xf32>
    %30 = vector.broadcast %28 : vector<1x12xf32> to vector<2x12xf32>
    %31 = arith.mulf %29, %30 : vector<2x12xf32>
    %32 = arith.addf %26, %31 : vector<2x12xf32>
    %33 = vector.extract_strided_slice %13 {offsets = [0, 3], sizes = [2, 1], strides = [1, 1]} : vector<2x4xf32> to vector<2x1xf32>
    %34 = vector.extract_strided_slice %9 {offsets = [3, 0], sizes = [1, 12], strides = [1, 1]} : vector<4x12xf32> to vector<1x12xf32>
    %35 = vector.broadcast %33 : vector<2x1xf32> to vector<2x12xf32>
    %36 = vector.broadcast %34 : vector<1x12xf32> to vector<2x12xf32>
    %37 = arith.mulf %35, %36 : vector<2x12xf32>
    %38 = arith.addf %32, %37 : vector<2x12xf32>
    %39 = vector.extract_strided_slice %14 {offsets = [0, 0], sizes = [2, 4], strides = [1, 1]} : vector<2x12xf32> to vector<2x4xf32>
    %40 = vector.extract_strided_slice %38 {offsets = [0, 0], sizes = [2, 4], strides = [1, 1]} : vector<2x12xf32> to vector<2x4xf32>
    %41 = arith.addf %39, %40 : vector<2x4xf32>
    %42 = arith.negf %41 : vector<2x4xf32>
    %43 = math.exp %42 : vector<2x4xf32>
    %cst_15 = arith.constant 1.000000e+00 : f32
    %44 = vector.broadcast %cst_15 : f32 to vector<2x4xf32>
    %45 = arith.addf %44, %43 : vector<2x4xf32>
    %46 = arith.divf %44, %45 : vector<2x4xf32>
    %47 = vector.extract_strided_slice %14 {offsets = [0, 4], sizes = [2, 4], strides = [1, 1]} : vector<2x12xf32> to vector<2x4xf32>
    %48 = vector.extract_strided_slice %38 {offsets = [0, 4], sizes = [2, 4], strides = [1, 1]} : vector<2x12xf32> to vector<2x4xf32>
    %49 = arith.addf %47, %48 : vector<2x4xf32>
    %50 = arith.negf %49 : vector<2x4xf32>
    %51 = math.exp %50 : vector<2x4xf32>
    %cst_16 = arith.constant 1.000000e+00 : f32
    %52 = vector.broadcast %cst_16 : f32 to vector<2x4xf32>
    %53 = arith.addf %52, %51 : vector<2x4xf32>
    %54 = arith.divf %52, %53 : vector<2x4xf32>
    %55 = vector.extract_strided_slice %14 {offsets = [0, 8], sizes = [2, 4], strides = [1, 1]} : vector<2x12xf32> to vector<2x4xf32>
    %56 = vector.extract_strided_slice %38 {offsets = [0, 8], sizes = [2, 4], strides = [1, 1]} : vector<2x12xf32> to vector<2x4xf32>
    %57 = arith.mulf %46, %56 : vector<2x4xf32>
    %58 = arith.addf %55, %57 : vector<2x4xf32>
    %59 = math.tanh %58 : vector<2x4xf32>
    %cst_17 = arith.constant 1.000000e+00 : f32
    %60 = vector.broadcast %cst_17 : f32 to vector<2x4xf32>
    %61 = arith.subf %60, %54 : vector<2x4xf32>
    %62 = arith.mulf %61, %59 : vector<2x4xf32>
    %63 = arith.mulf %54, %13 : vector<2x4xf32>
    %64 = arith.addf %62, %63 : vector<2x4xf32>
    %65 = vector.extract_strided_slice %5 {offsets = [2, 0], sizes = [2, 12], strides = [1, 1]} : vector<14x12xf32> to vector<2x12xf32>
    %66 = vector.extract_strided_slice %64 {offsets = [0, 0], sizes = [2, 1], strides = [1, 1]} : vector<2x4xf32> to vector<2x1xf32>
    %67 = vector.extract_strided_slice %9 {offsets = [0, 0], sizes = [1, 12], strides = [1, 1]} : vector<4x12xf32> to vector<1x12xf32>
    %68 = vector.broadcast %66 : vector<2x1xf32> to vector<2x12xf32>
    %69 = vector.broadcast %67 : vector<1x12xf32> to vector<2x12xf32>
    %70 = arith.mulf %68, %69 : vector<2x12xf32>
    %71 = arith.addf %12, %70 : vector<2x12xf32>
    %72 = vector.extract_strided_slice %64 {offsets = [0, 1], sizes = [2, 1], strides = [1, 1]} : vector<2x4xf32> to vector<2x1xf32>
    %73 = vector.extract_strided_slice %9 {offsets = [1, 0], sizes = [1, 12], strides = [1, 1]} : vector<4x12xf32> to vector<1x12xf32>
    %74 = vector.broadcast %72 : vector<2x1xf32> to vector<2x12xf32>
    %75 = vector.broadcast %73 : vector<1x12xf32> to vector<2x12xf32>
    %76 = arith.mulf %74, %75 : vector<2x12xf32>
    %77 = arith.addf %71, %76 : vector<2x12xf32>
    %78 = vector.extract_strided_slice %64 {offsets = [0, 2], sizes = [2, 1], strides = [1, 1]} : vector<2x4xf32> to vector<2x1xf32>
    %79 = vector.extract_strided_slice %9 {offsets = [2, 0], sizes = [1, 12], strides = [1, 1]} : vector<4x12xf32> to vector<1x12xf32>
    %80 = vector.broadcast %78 : vector<2x1xf32> to vector<2x12xf32>
    %81 = vector.broadcast %79 : vector<1x12xf32> to vector<2x12xf32>
    %82 = arith.mulf %80, %81 : vector<2x12xf32>
    %83 = arith.addf %77, %82 : vector<2x12xf32>
    %84 = vector.extract_strided_slice %64 {offsets = [0, 3], sizes = [2, 1], strides = [1, 1]} : vector<2x4xf32> to vector<2x1xf32>
    %85 = vector.extract_strided_slice %9 {offsets = [3, 0], sizes = [1, 12], strides = [1, 1]} : vector<4x12xf32> to vector<1x12xf32>
    %86 = vector.broadcast %84 : vector<2x1xf32> to vector<2x12xf32>
    %87 = vector.broadcast %85 : vector<1x12xf32> to vector<2x12xf32>
    %88 = arith.mulf %86, %87 : vector<2x12xf32>
    %89 = arith.addf %83, %88 : vector<2x12xf32>
    %90 = vector.extract_strided_slice %65 {offsets = [0, 0], sizes = [2, 4], strides = [1, 1]} : vector<2x12xf32> to vector<2x4xf32>
    %91 = vector.extract_strided_slice %89 {offsets = [0, 0], sizes = [2, 4], strides = [1, 1]} : vector<2x12xf32> to vector<2x4xf32>
    %92 = arith.addf %90, %91 : vector<2x4xf32>
    %93 = arith.negf %92 : vector<2x4xf32>
    %94 = math.exp %93 : vector<2x4xf32>
    %cst_18 = arith.constant 1.000000e+00 : f32
    %95 = vector.broadcast %cst_18 : f32 to vector<2x4xf32>
    %96 = arith.addf %95, %94 : vector<2x4xf32>
    %97 = arith.divf %95, %96 : vector<2x4xf32>
    %98 = vector.extract_strided_slice %65 {offsets = [0, 4], sizes = [2, 4], strides = [1, 1]} : vector<2x12xf32> to vector<2x4xf32>
    %99 = vector.extract_strided_slice %89 {offsets = [0, 4], sizes = [2, 4], strides = [1, 1]} : vector<2x12xf32> to vector<2x4xf32>
    %100 = arith.addf %98, %99 : vector<2x4xf32>
    %101 = arith.negf %100 : vector<2x4xf32>
    %102 = math.exp %101 : vector<2x4xf32>
    %cst_19 = arith.constant 1.000000e+00 : f32
    %103 = vector.broadcast %cst_19 : f32 to vector<2x4xf32>
    %104 = arith.addf %103, %102 : vector<2x4xf32>
    %105 = arith.divf %103, %104 : vector<2x4xf32>
    %106 = vector.extract_strided_slice %65 {offsets = [0, 8], sizes = [2, 4], strides = [1, 1]} : vector<2x12xf32> to vector<2x4xf32>
    %107 = vector.extract_strided_slice %89 {offsets = [0, 8], sizes = [2, 4], strides = [1, 1]} : vector<2x12xf32> to vector<2x4xf32>
    %108 = arith.mulf %97, %107 : vector<2x4xf32>
    %109 = arith.addf %106, %108 : vector<2x4xf32>
    %110 = math.tanh %109 : vector<2x4xf32>
    %cst_20 = arith.constant 1.000000e+00 : f32
    %111 = vector.broadcast %cst_20 : f32 to vector<2x4xf32>
    %112 = arith.subf %111, %105 : vector<2x4xf32>
    %113 = arith.mulf %112, %110 : vector<2x4xf32>
    %114 = arith.mulf %105, %64 : vector<2x4xf32>
    %115 = arith.addf %113, %114 : vector<2x4xf32>
    %116 = vector.extract_strided_slice %5 {offsets = [4, 0], sizes = [2, 12], strides = [1, 1]} : vector<14x12xf32> to vector<2x12xf32>
    %117 = vector.extract_strided_slice %115 {offsets = [0, 0], sizes = [2, 1], strides = [1, 1]} : vector<2x4xf32> to vector<2x1xf32>
    %118 = vector.extract_strided_slice %9 {offsets = [0, 0], sizes = [1, 12], strides = [1, 1]} : vector<4x12xf32> to vector<1x12xf32>
    %119 = vector.broadcast %117 : vector<2x1xf32> to vector<2x12xf32>
    %120 = vector.broadcast %118 : vector<1x12xf32> to vector<2x12xf32>
    %121 = arith.mulf %119, %120 : vector<2x12xf32>
    %122 = arith.addf %12, %121 : vector<2x12xf32>
    %123 = vector.extract_strided_slice %115 {offsets = [0, 1], sizes = [2, 1], strides = [1, 1]} : vector<2x4xf32> to vector<2x1xf32>
    %124 = vector.extract_strided_slice %9 {offsets = [1, 0], sizes = [1, 12], strides = [1, 1]} : vector<4x12xf32> to vector<1x12xf32>
    %125 = vector.broadcast %123 : vector<2x1xf32> to vector<2x12xf32>
    %126 = vector.broadcast %124 : vector<1x12xf32> to vector<2x12xf32>
    %127 = arith.mulf %125, %126 : vector<2x12xf32>
    %128 = arith.addf %122, %127 : vector<2x12xf32>
    %129 = vector.extract_strided_slice %115 {offsets = [0, 2], sizes = [2, 1], strides = [1, 1]} : vector<2x4xf32> to vector<2x1xf32>
    %130 = vector.extract_strided_slice %9 {offsets = [2, 0], sizes = [1, 12], strides = [1, 1]} : vector<4x12xf32> to vector<1x12xf32>
    %131 = vector.broadcast %129 : vector<2x1xf32> to vector<2x12xf32>
    %132 = vector.broadcast %130 : vector<1x12xf32> to vector<2x12xf32>
    %133 = arith.mulf %131, %132 : vector<2x12xf32>
    %134 = arith.addf %128, %133 : vector<2x12xf32>
    %135 = vector.extract_strided_slice %115 {offsets = [0, 3], sizes = [2, 1], strides = [1, 1]} : vector<2x4xf32> to vector<2x1xf32>
    %136 = vector.extract_strided_slice %9 {offsets = [3, 0], sizes = [1, 12], strides = [1, 1]} : vector<4x12xf32> to vector<1x12xf32>
    %137 = vector.broadcast %135 : vector<2x1xf32> to vector<2x12xf32>
    %138 = vector.broadcast %136 : vector<1x12xf32> to vector<2x12xf32>
    %139 = arith.mulf %137, %138 : vector<2x12xf32>
    %140 = arith.addf %134, %139 : vector<2x12xf32>
    %141 = vector.extract_strided_slice %116 {offsets = [0, 0], sizes = [2, 4], strides = [1, 1]} : vector<2x12xf32> to vector<2x4xf32>
    %142 = vector.extract_strided_slice %140 {offsets = [0, 0], sizes = [2, 4], strides = [1, 1]} : vector<2x12xf32> to vector<2x4xf32>
    %143 = arith.addf %141, %142 : vector<2x4xf32>
    %144 = arith.negf %143 : vector<2x4xf32>
    %145 = math.exp %144 : vector<2x4xf32>
    %cst_21 = arith.constant 1.000000e+00 : f32
    %146 = vector.broadcast %cst_21 : f32 to vector<2x4xf32>
    %147 = arith.addf %146, %145 : vector<2x4xf32>
    %148 = arith.divf %146, %147 : vector<2x4xf32>
    %149 = vector.extract_strided_slice %116 {offsets = [0, 4], sizes = [2, 4], strides = [1, 1]} : vector<2x12xf32> to vector<2x4xf32>
    %150 = vector.extract_strided_slice %140 {offsets = [0, 4], sizes = [2, 4], strides = [1, 1]} : vector<2x12xf32> to vector<2x4xf32>
    %151 = arith.addf %149, %150 : vector<2x4xf32>
    %152 = arith.negf %151 : vector<2x4xf32>
    %153 = math.exp %152 : vector<2x4xf32>
    %cst_22 = arith.constant 1.000000e+00 : f32
    %154 = vector.broadcast %cst_22 : f32 to vector<2x4xf32>
    %155 = arith.addf %154, %153 : vector<2x4xf32>
    %156 = arith.divf %154, %155 : vector<2x4xf32>
    %157 = vector.extract_strided_slice %116 {offsets = [0, 8], sizes = [2, 4], strides = [1, 1]} : vector<2x12xf32> to vector<2x4xf32>
    %158 = vector.extract_strided_slice %140 {offsets = [0, 8], sizes = [2, 4], strides = [1, 1]} : vector<2x12xf32> to vector<2x4xf32>
    %159 = arith.mulf %148, %158 : vector<2x4xf32>
    %160 = arith.addf %157, %159 : vector<2x4xf32>
    %161 = math.tanh %160 : vector<2x4xf32>
    %cst_23 = arith.constant 1.000000e+00 : f32
    %162 = vector.broadcast %cst_23 : f32 to vector<2x4xf32>
    %163 = arith.subf %162, %156 : vector<2x4xf32>
    %164 = arith.mulf %163, %161 : vector<2x4xf32>
    %165 = arith.mulf %156, %115 : vector<2x4xf32>
    %166 = arith.addf %164, %165 : vector<2x4xf32>
    %167 = vector.extract_strided_slice %5 {offsets = [6, 0], sizes = [2, 12], strides = [1, 1]} : vector<14x12xf32> to vector<2x12xf32>
    %168 = vector.extract_strided_slice %166 {offsets = [0, 0], sizes = [2, 1], strides = [1, 1]} : vector<2x4xf32> to vector<2x1xf32>
    %169 = vector.extract_strided_slice %9 {offsets = [0, 0], sizes = [1, 12], strides = [1, 1]} : vector<4x12xf32> to vector<1x12xf32>
    %170 = vector.broadcast %168 : vector<2x1xf32> to vector<2x12xf32>
    %171 = vector.broadcast %169 : vector<1x12xf32> to vector<2x12xf32>
    %172 = arith.mulf %170, %171 : vector<2x12xf32>
    %173 = arith.addf %12, %172 : vector<2x12xf32>
    %174 = vector.extract_strided_slice %166 {offsets = [0, 1], sizes = [2, 1], strides = [1, 1]} : vector<2x4xf32> to vector<2x1xf32>
    %175 = vector.extract_strided_slice %9 {offsets = [1, 0], sizes = [1, 12], strides = [1, 1]} : vector<4x12xf32> to vector<1x12xf32>
    %176 = vector.broadcast %174 : vector<2x1xf32> to vector<2x12xf32>
    %177 = vector.broadcast %175 : vector<1x12xf32> to vector<2x12xf32>
    %178 = arith.mulf %176, %177 : vector<2x12xf32>
    %179 = arith.addf %173, %178 : vector<2x12xf32>
    %180 = vector.extract_strided_slice %166 {offsets = [0, 2], sizes = [2, 1], strides = [1, 1]} : vector<2x4xf32> to vector<2x1xf32>
    %181 = vector.extract_strided_slice %9 {offsets = [2, 0], sizes = [1, 12], strides = [1, 1]} : vector<4x12xf32> to vector<1x12xf32>
    %182 = vector.broadcast %180 : vector<2x1xf32> to vector<2x12xf32>
    %183 = vector.broadcast %181 : vector<1x12xf32> to vector<2x12xf32>
    %184 = arith.mulf %182, %183 : vector<2x12xf32>
    %185 = arith.addf %179, %184 : vector<2x12xf32>
    %186 = vector.extract_strided_slice %166 {offsets = [0, 3], sizes = [2, 1], strides = [1, 1]} : vector<2x4xf32> to vector<2x1xf32>
    %187 = vector.extract_strided_slice %9 {offsets = [3, 0], sizes = [1, 12], strides = [1, 1]} : vector<4x12xf32> to vector<1x12xf32>
    %188 = vector.broadcast %186 : vector<2x1xf32> to vector<2x12xf32>
    %189 = vector.broadcast %187 : vector<1x12xf32> to vector<2x12xf32>
    %190 = arith.mulf %188, %189 : vector<2x12xf32>
    %191 = arith.addf %185, %190 : vector<2x12xf32>
    %192 = vector.extract_strided_slice %167 {offsets = [0, 0], sizes = [2, 4], strides = [1, 1]} : vector<2x12xf32> to vector<2x4xf32>
    %193 = vector.extract_strided_slice %191 {offsets = [0, 0], sizes = [2, 4], strides = [1, 1]} : vector<2x12xf32> to vector<2x4xf32>
    %194 = arith.addf %192, %193 : vector<2x4xf32>
    %195 = arith.negf %194 : vector<2x4xf32>
    %196 = math.exp %195 : vector<2x4xf32>
    %cst_24 = arith.constant 1.000000e+00 : f32
    %197 = vector.broadcast %cst_24 : f32 to vector<2x4xf32>
    %198 = arith.addf %197, %196 : vector<2x4xf32>
    %199 = arith.divf %197, %198 : vector<2x4xf32>
    %200 = vector.extract_strided_slice %167 {offsets = [0, 4], sizes = [2, 4], strides = [1, 1]} : vector<2x12xf32> to vector<2x4xf32>
    %201 = vector.extract_strided_slice %191 {offsets = [0, 4], sizes = [2, 4], strides = [1, 1]} : vector<2x12xf32> to vector<2x4xf32>
    %202 = arith.addf %200, %201 : vector<2x4xf32>
    %203 = arith.negf %202 : vector<2x4xf32>
    %204 = math.exp %203 : vector<2x4xf32>
    %cst_25 = arith.constant 1.000000e+00 : f32
    %205 = vector.broadcast %cst_25 : f32 to vector<2x4xf32>
    %206 = arith.addf %205, %204 : vector<2x4xf32>
    %207 = arith.divf %205, %206 : vector<2x4xf32>
    %208 = vector.extract_strided_slice %167 {offsets = [0, 8], sizes = [2, 4], strides = [1, 1]} : vector<2x12xf32> to vector<2x4xf32>
    %209 = vector.extract_strided_slice %191 {offsets = [0, 8], sizes = [2, 4], strides = [1, 1]} : vector<2x12xf32> to vector<2x4xf32>
    %210 = arith.mulf %199, %209 : vector<2x4xf32>
    %211 = arith.addf %208, %210 : vector<2x4xf32>
    %212 = math.tanh %211 : vector<2x4xf32>
    %cst_26 = arith.constant 1.000000e+00 : f32
    %213 = vector.broadcast %cst_26 : f32 to vector<2x4xf32>
    %214 = arith.subf %213, %207 : vector<2x4xf32>
    %215 = arith.mulf %214, %212 : vector<2x4xf32>
    %216 = arith.mulf %207, %166 : vector<2x4xf32>
    %217 = arith.addf %215, %216 : vector<2x4xf32>
    %218 = vector.extract_strided_slice %5 {offsets = [8, 0], sizes = [2, 12], strides = [1, 1]} : vector<14x12xf32> to vector<2x12xf32>
    %219 = vector.extract_strided_slice %217 {offsets = [0, 0], sizes = [2, 1], strides = [1, 1]} : vector<2x4xf32> to vector<2x1xf32>
    %220 = vector.extract_strided_slice %9 {offsets = [0, 0], sizes = [1, 12], strides = [1, 1]} : vector<4x12xf32> to vector<1x12xf32>
    %221 = vector.broadcast %219 : vector<2x1xf32> to vector<2x12xf32>
    %222 = vector.broadcast %220 : vector<1x12xf32> to vector<2x12xf32>
    %223 = arith.mulf %221, %222 : vector<2x12xf32>
    %224 = arith.addf %12, %223 : vector<2x12xf32>
    %225 = vector.extract_strided_slice %217 {offsets = [0, 1], sizes = [2, 1], strides = [1, 1]} : vector<2x4xf32> to vector<2x1xf32>
    %226 = vector.extract_strided_slice %9 {offsets = [1, 0], sizes = [1, 12], strides = [1, 1]} : vector<4x12xf32> to vector<1x12xf32>
    %227 = vector.broadcast %225 : vector<2x1xf32> to vector<2x12xf32>
    %228 = vector.broadcast %226 : vector<1x12xf32> to vector<2x12xf32>
    %229 = arith.mulf %227, %228 : vector<2x12xf32>
    %230 = arith.addf %224, %229 : vector<2x12xf32>
    %231 = vector.extract_strided_slice %217 {offsets = [0, 2], sizes = [2, 1], strides = [1, 1]} : vector<2x4xf32> to vector<2x1xf32>
    %232 = vector.extract_strided_slice %9 {offsets = [2, 0], sizes = [1, 12], strides = [1, 1]} : vector<4x12xf32> to vector<1x12xf32>
    %233 = vector.broadcast %231 : vector<2x1xf32> to vector<2x12xf32>
    %234 = vector.broadcast %232 : vector<1x12xf32> to vector<2x12xf32>
    %235 = arith.mulf %233, %234 : vector<2x12xf32>
    %236 = arith.addf %230, %235 : vector<2x12xf32>
    %237 = vector.extract_strided_slice %217 {offsets = [0, 3], sizes = [2, 1], strides = [1, 1]} : vector<2x4xf32> to vector<2x1xf32>
    %238 = vector.extract_strided_slice %9 {offsets = [3, 0], sizes = [1, 12], strides = [1, 1]} : vector<4x12xf32> to vector<1x12xf32>
    %239 = vector.broadcast %237 : vector<2x1xf32> to vector<2x12xf32>
    %240 = vector.broadcast %238 : vector<1x12xf32> to vector<2x12xf32>
    %241 = arith.mulf %239, %240 : vector<2x12xf32>
    %242 = arith.addf %236, %241 : vector<2x12xf32>
    %243 = vector.extract_strided_slice %218 {offsets = [0, 0], sizes = [2, 4], strides = [1, 1]} : vector<2x12xf32> to vector<2x4xf32>
    %244 = vector.extract_strided_slice %242 {offsets = [0, 0], sizes = [2, 4], strides = [1, 1]} : vector<2x12xf32> to vector<2x4xf32>
    %245 = arith.addf %243, %244 : vector<2x4xf32>
    %246 = arith.negf %245 : vector<2x4xf32>
    %247 = math.exp %246 : vector<2x4xf32>
    %cst_27 = arith.constant 1.000000e+00 : f32
    %248 = vector.broadcast %cst_27 : f32 to vector<2x4xf32>
    %249 = arith.addf %248, %247 : vector<2x4xf32>
    %250 = arith.divf %248, %249 : vector<2x4xf32>
    %251 = vector.extract_strided_slice %218 {offsets = [0, 4], sizes = [2, 4], strides = [1, 1]} : vector<2x12xf32> to vector<2x4xf32>
    %252 = vector.extract_strided_slice %242 {offsets = [0, 4], sizes = [2, 4], strides = [1, 1]} : vector<2x12xf32> to vector<2x4xf32>
    %253 = arith.addf %251, %252 : vector<2x4xf32>
    %254 = arith.negf %253 : vector<2x4xf32>
    %255 = math.exp %254 : vector<2x4xf32>
    %cst_28 = arith.constant 1.000000e+00 : f32
    %256 = vector.broadcast %cst_28 : f32 to vector<2x4xf32>
    %257 = arith.addf %256, %255 : vector<2x4xf32>
    %258 = arith.divf %256, %257 : vector<2x4xf32>
    %259 = vector.extract_strided_slice %218 {offsets = [0, 8], sizes = [2, 4], strides = [1, 1]} : vector<2x12xf32> to vector<2x4xf32>
    %260 = vector.extract_strided_slice %242 {offsets = [0, 8], sizes = [2, 4], strides = [1, 1]} : vector<2x12xf32> to vector<2x4xf32>
    %261 = arith.mulf %250, %260 : vector<2x4xf32>
    %262 = arith.addf %259, %261 : vector<2x4xf32>
    %263 = math.tanh %262 : vector<2x4xf32>
    %cst_29 = arith.constant 1.000000e+00 : f32
    %264 = vector.broadcast %cst_29 : f32 to vector<2x4xf32>
    %265 = arith.subf %264, %258 : vector<2x4xf32>
    %266 = arith.mulf %265, %263 : vector<2x4xf32>
    %267 = arith.mulf %258, %217 : vector<2x4xf32>
    %268 = arith.addf %266, %267 : vector<2x4xf32>
    %269 = vector.extract_strided_slice %5 {offsets = [10, 0], sizes = [2, 12], strides = [1, 1]} : vector<14x12xf32> to vector<2x12xf32>
    %270 = vector.extract_strided_slice %268 {offsets = [0, 0], sizes = [2, 1], strides = [1, 1]} : vector<2x4xf32> to vector<2x1xf32>
    %271 = vector.extract_strided_slice %9 {offsets = [0, 0], sizes = [1, 12], strides = [1, 1]} : vector<4x12xf32> to vector<1x12xf32>
    %272 = vector.broadcast %270 : vector<2x1xf32> to vector<2x12xf32>
    %273 = vector.broadcast %271 : vector<1x12xf32> to vector<2x12xf32>
    %274 = arith.mulf %272, %273 : vector<2x12xf32>
    %275 = arith.addf %12, %274 : vector<2x12xf32>
    %276 = vector.extract_strided_slice %268 {offsets = [0, 1], sizes = [2, 1], strides = [1, 1]} : vector<2x4xf32> to vector<2x1xf32>
    %277 = vector.extract_strided_slice %9 {offsets = [1, 0], sizes = [1, 12], strides = [1, 1]} : vector<4x12xf32> to vector<1x12xf32>
    %278 = vector.broadcast %276 : vector<2x1xf32> to vector<2x12xf32>
    %279 = vector.broadcast %277 : vector<1x12xf32> to vector<2x12xf32>
    %280 = arith.mulf %278, %279 : vector<2x12xf32>
    %281 = arith.addf %275, %280 : vector<2x12xf32>
    %282 = vector.extract_strided_slice %268 {offsets = [0, 2], sizes = [2, 1], strides = [1, 1]} : vector<2x4xf32> to vector<2x1xf32>
    %283 = vector.extract_strided_slice %9 {offsets = [2, 0], sizes = [1, 12], strides = [1, 1]} : vector<4x12xf32> to vector<1x12xf32>
    %284 = vector.broadcast %282 : vector<2x1xf32> to vector<2x12xf32>
    %285 = vector.broadcast %283 : vector<1x12xf32> to vector<2x12xf32>
    %286 = arith.mulf %284, %285 : vector<2x12xf32>
    %287 = arith.addf %281, %286 : vector<2x12xf32>
    %288 = vector.extract_strided_slice %268 {offsets = [0, 3], sizes = [2, 1], strides = [1, 1]} : vector<2x4xf32> to vector<2x1xf32>
    %289 = vector.extract_strided_slice %9 {offsets = [3, 0], sizes = [1, 12], strides = [1, 1]} : vector<4x12xf32> to vector<1x12xf32>
    %290 = vector.broadcast %288 : vector<2x1xf32> to vector<2x12xf32>
    %291 = vector.broadcast %289 : vector<1x12xf32> to vector<2x12xf32>
    %292 = arith.mulf %290, %291 : vector<2x12xf32>
    %293 = arith.addf %287, %292 : vector<2x12xf32>
    %294 = vector.extract_strided_slice %269 {offsets = [0, 0], sizes = [2, 4], strides = [1, 1]} : vector<2x12xf32> to vector<2x4xf32>
    %295 = vector.extract_strided_slice %293 {offsets = [0, 0], sizes = [2, 4], strides = [1, 1]} : vector<2x12xf32> to vector<2x4xf32>
    %296 = arith.addf %294, %295 : vector<2x4xf32>
    %297 = arith.negf %296 : vector<2x4xf32>
    %298 = math.exp %297 : vector<2x4xf32>
    %cst_30 = arith.constant 1.000000e+00 : f32
    %299 = vector.broadcast %cst_30 : f32 to vector<2x4xf32>
    %300 = arith.addf %299, %298 : vector<2x4xf32>
    %301 = arith.divf %299, %300 : vector<2x4xf32>
    %302 = vector.extract_strided_slice %269 {offsets = [0, 4], sizes = [2, 4], strides = [1, 1]} : vector<2x12xf32> to vector<2x4xf32>
    %303 = vector.extract_strided_slice %293 {offsets = [0, 4], sizes = [2, 4], strides = [1, 1]} : vector<2x12xf32> to vector<2x4xf32>
    %304 = arith.addf %302, %303 : vector<2x4xf32>
    %305 = arith.negf %304 : vector<2x4xf32>
    %306 = math.exp %305 : vector<2x4xf32>
    %cst_31 = arith.constant 1.000000e+00 : f32
    %307 = vector.broadcast %cst_31 : f32 to vector<2x4xf32>
    %308 = arith.addf %307, %306 : vector<2x4xf32>
    %309 = arith.divf %307, %308 : vector<2x4xf32>
    %310 = vector.extract_strided_slice %269 {offsets = [0, 8], sizes = [2, 4], strides = [1, 1]} : vector<2x12xf32> to vector<2x4xf32>
    %311 = vector.extract_strided_slice %293 {offsets = [0, 8], sizes = [2, 4], strides = [1, 1]} : vector<2x12xf32> to vector<2x4xf32>
    %312 = arith.mulf %301, %311 : vector<2x4xf32>
    %313 = arith.addf %310, %312 : vector<2x4xf32>
    %314 = math.tanh %313 : vector<2x4xf32>
    %cst_32 = arith.constant 1.000000e+00 : f32
    %315 = vector.broadcast %cst_32 : f32 to vector<2x4xf32>
    %316 = arith.subf %315, %309 : vector<2x4xf32>
    %317 = arith.mulf %316, %314 : vector<2x4xf32>
    %318 = arith.mulf %309, %268 : vector<2x4xf32>
    %319 = arith.addf %317, %318 : vector<2x4xf32>
    %320 = vector.extract_strided_slice %5 {offsets = [12, 0], sizes = [2, 12], strides = [1, 1]} : vector<14x12xf32> to vector<2x12xf32>
    %321 = vector.extract_strided_slice %319 {offsets = [0, 0], sizes = [2, 1], strides = [1, 1]} : vector<2x4xf32> to vector<2x1xf32>
    %322 = vector.extract_strided_slice %9 {offsets = [0, 0], sizes = [1, 12], strides = [1, 1]} : vector<4x12xf32> to vector<1x12xf32>
    %323 = vector.broadcast %321 : vector<2x1xf32> to vector<2x12xf32>
    %324 = vector.broadcast %322 : vector<1x12xf32> to vector<2x12xf32>
    %325 = arith.mulf %323, %324 : vector<2x12xf32>
    %326 = arith.addf %12, %325 : vector<2x12xf32>
    %327 = vector.extract_strided_slice %319 {offsets = [0, 1], sizes = [2, 1], strides = [1, 1]} : vector<2x4xf32> to vector<2x1xf32>
    %328 = vector.extract_strided_slice %9 {offsets = [1, 0], sizes = [1, 12], strides = [1, 1]} : vector<4x12xf32> to vector<1x12xf32>
    %329 = vector.broadcast %327 : vector<2x1xf32> to vector<2x12xf32>
    %330 = vector.broadcast %328 : vector<1x12xf32> to vector<2x12xf32>
    %331 = arith.mulf %329, %330 : vector<2x12xf32>
    %332 = arith.addf %326, %331 : vector<2x12xf32>
    %333 = vector.extract_strided_slice %319 {offsets = [0, 2], sizes = [2, 1], strides = [1, 1]} : vector<2x4xf32> to vector<2x1xf32>
    %334 = vector.extract_strided_slice %9 {offsets = [2, 0], sizes = [1, 12], strides = [1, 1]} : vector<4x12xf32> to vector<1x12xf32>
    %335 = vector.broadcast %333 : vector<2x1xf32> to vector<2x12xf32>
    %336 = vector.broadcast %334 : vector<1x12xf32> to vector<2x12xf32>
    %337 = arith.mulf %335, %336 : vector<2x12xf32>
    %338 = arith.addf %332, %337 : vector<2x12xf32>
    %339 = vector.extract_strided_slice %319 {offsets = [0, 3], sizes = [2, 1], strides = [1, 1]} : vector<2x4xf32> to vector<2x1xf32>
    %340 = vector.extract_strided_slice %9 {offsets = [3, 0], sizes = [1, 12], strides = [1, 1]} : vector<4x12xf32> to vector<1x12xf32>
    %341 = vector.broadcast %339 : vector<2x1xf32> to vector<2x12xf32>
    %342 = vector.broadcast %340 : vector<1x12xf32> to vector<2x12xf32>
    %343 = arith.mulf %341, %342 : vector<2x12xf32>
    %344 = arith.addf %338, %343 : vector<2x12xf32>
    %345 = vector.extract_strided_slice %320 {offsets = [0, 0], sizes = [2, 4], strides = [1, 1]} : vector<2x12xf32> to vector<2x4xf32>
    %346 = vector.extract_strided_slice %344 {offsets = [0, 0], sizes = [2, 4], strides = [1, 1]} : vector<2x12xf32> to vector<2x4xf32>
    %347 = arith.addf %345, %346 : vector<2x4xf32>
    %348 = arith.negf %347 : vector<2x4xf32>
    %349 = math.exp %348 : vector<2x4xf32>
    %cst_33 = arith.constant 1.000000e+00 : f32
    %350 = vector.broadcast %cst_33 : f32 to vector<2x4xf32>
    %351 = arith.addf %350, %349 : vector<2x4xf32>
    %352 = arith.divf %350, %351 : vector<2x4xf32>
    %353 = vector.extract_strided_slice %320 {offsets = [0, 4], sizes = [2, 4], strides = [1, 1]} : vector<2x12xf32> to vector<2x4xf32>
    %354 = vector.extract_strided_slice %344 {offsets = [0, 4], sizes = [2, 4], strides = [1, 1]} : vector<2x12xf32> to vector<2x4xf32>
    %355 = arith.addf %353, %354 : vector<2x4xf32>
    %356 = arith.negf %355 : vector<2x4xf32>
    %357 = math.exp %356 : vector<2x4xf32>
    %cst_34 = arith.constant 1.000000e+00 : f32
    %358 = vector.broadcast %cst_34 : f32 to vector<2x4xf32>
    %359 = arith.addf %358, %357 : vector<2x4xf32>
    %360 = arith.divf %358, %359 : vector<2x4xf32>
    %361 = vector.extract_strided_slice %320 {offsets = [0, 8], sizes = [2, 4], strides = [1, 1]} : vector<2x12xf32> to vector<2x4xf32>
    %362 = vector.extract_strided_slice %344 {offsets = [0, 8], sizes = [2, 4], strides = [1, 1]} : vector<2x12xf32> to vector<2x4xf32>
    %363 = arith.mulf %352, %362 : vector<2x4xf32>
    %364 = arith.addf %361, %363 : vector<2x4xf32>
    %365 = math.tanh %364 : vector<2x4xf32>
    %cst_35 = arith.constant 1.000000e+00 : f32
    %366 = vector.broadcast %cst_35 : f32 to vector<2x4xf32>
    %367 = arith.subf %366, %360 : vector<2x4xf32>
    %368 = arith.mulf %367, %365 : vector<2x4xf32>
    %369 = arith.mulf %360, %319 : vector<2x4xf32>
    %370 = arith.addf %368, %369 : vector<2x4xf32>
    %cst_36 = arith.constant dense<0xFF800000> : vector<2xf32>
    %371 = vector.multi_reduction <maximumf>, %370, %cst_36 [1] : vector<2x4xf32> to vector<2xf32>
    %372 = vector.shape_cast %371 : vector<2xf32> to vector<2x1xf32>
    %373 = vector.broadcast %372 : vector<2x1xf32> to vector<2x4xf32>
    %374 = arith.subf %370, %373 : vector<2x4xf32>
    %375 = math.exp %374 : vector<2x4xf32>
    %cst_37 = arith.constant dense<0.000000e+00> : vector<2xf32>
    %376 = vector.multi_reduction <add>, %375, %cst_37 [1] : vector<2x4xf32> to vector<2xf32>
    %377 = vector.shape_cast %376 : vector<2xf32> to vector<2x1xf32>
    %378 = tpu.reciprocal %377 {approx = true} : vector<2x1xf32> -> vector<2x1xf32>
    %379 = vector.broadcast %378 : vector<2x1xf32> to vector<2x4xf32>
    %380 = arith.mulf %375, %379 : vector<2x4xf32>
    %381 = vector.extract_strided_slice %380 {offsets = [0, 0], sizes = [2, 1], strides = [1, 1]} : vector<2x4xf32> to vector<2x1xf32>
    %382 = vector.extract_strided_slice %8 {offsets = [0, 0], sizes = [2, 6], strides = [1, 1]} : vector<2x24xf32> to vector<2x6xf32>
    %383 = vector.broadcast %381 : vector<2x1xf32> to vector<2x6xf32>
    %384 = arith.mulf %383, %382 : vector<2x6xf32>
    %385 = vector.extract_strided_slice %380 {offsets = [0, 1], sizes = [2, 1], strides = [1, 1]} : vector<2x4xf32> to vector<2x1xf32>
    %386 = vector.extract_strided_slice %8 {offsets = [0, 6], sizes = [2, 6], strides = [1, 1]} : vector<2x24xf32> to vector<2x6xf32>
    %387 = vector.broadcast %385 : vector<2x1xf32> to vector<2x6xf32>
    %388 = arith.mulf %387, %386 : vector<2x6xf32>
    %389 = arith.addf %384, %388 : vector<2x6xf32>
    %390 = vector.extract_strided_slice %380 {offsets = [0, 2], sizes = [2, 1], strides = [1, 1]} : vector<2x4xf32> to vector<2x1xf32>
    %391 = vector.extract_strided_slice %8 {offsets = [0, 12], sizes = [2, 6], strides = [1, 1]} : vector<2x24xf32> to vector<2x6xf32>
    %392 = vector.broadcast %390 : vector<2x1xf32> to vector<2x6xf32>
    %393 = arith.mulf %392, %391 : vector<2x6xf32>
    %394 = arith.addf %389, %393 : vector<2x6xf32>
    %395 = vector.extract_strided_slice %380 {offsets = [0, 3], sizes = [2, 1], strides = [1, 1]} : vector<2x4xf32> to vector<2x1xf32>
    %396 = vector.extract_strided_slice %8 {offsets = [0, 18], sizes = [2, 6], strides = [1, 1]} : vector<2x24xf32> to vector<2x6xf32>
    %397 = vector.broadcast %395 : vector<2x1xf32> to vector<2x6xf32>
    %398 = arith.mulf %397, %396 : vector<2x6xf32>
    %399 = arith.addf %394, %398 : vector<2x6xf32>
    %c0_38 = arith.constant 0 : index
    %c0_39 = arith.constant 0 : index
    %400 = vector.load %arg7[%c0_38, %c0_39] : memref<2x6xf32, #tpu.memory_space<vmem>>, vector<2x6xf32>
    tpu.vector_store %arg7[%c0_38, %c0_39], %399 {strides = array<i32>} : memref<2x6xf32, #tpu.memory_space<vmem>>, vector<2x6xf32>,
    return
  }
}

</mosaic_0001>

<llo_original>
// kernel: _obs_ensemble_forward_impl.1
$region0: #{_obs_ensemble_forward_impl.1}
  #allocation0 [shape = 'u32[]', space=smem, size = 0x4, offset = 0x4, fixed_abs, tag = 'smem constant byte address 0x4 - core index']
  #allocation1 [shape = 'u32[144,128]{1,0:T(1,128)}', space=vmem, size = 0x12000, scoped, tag = 'internal scratch']
  %s0 = inlined_call_operand.vmem [shape: f32[14,6], index: 0, kind: input, shape index: {}]
  %s1 = inlined_call_operand.vmem [shape: f32[6,12], index: 1, kind: input, shape index: {}]
  %s2 = inlined_call_operand.vmem [shape: f32[1,12], index: 2, kind: input, shape index: {}]
  %s3 = inlined_call_operand.vmem [shape: f32[4,12], index: 3, kind: input, shape index: {}]
  %s4 = inlined_call_operand.vmem [shape: f32[1,12], index: 4, kind: input, shape index: {}]
  %s5 = inlined_call_operand.vmem [shape: f32[8,24], index: 5, kind: input, shape index: {}]
  %s6 = inlined_call_operand.vmem [shape: f32[2,8], index: 6, kind: input, shape index: {}]
  %s7 = inlined_call_operand.hbm [shape: f32[2,6], index: 7, kind: output, shape index: {}]
  %s8 = sld [smem:[#allocation0]]
  $region38: #{_obs_ensemble_forward_impl.1} parent=0
    _
  %s10 = ssub.s32 1, %s8
  %s11 = scalar_select 0, %s10, %s8
  $region1: #{_obs_ensemble_forward_impl.1} parent=0
    #allocation2 [shape = 'u8[1024]{0}', space=vmem, size = 0x400, scoped, tag = 'output window, operand 0, single buffered']
    #allocation3 [shape = 's32[1]{0}', space=sflag, size = 0x4, scoped, tag = 'scoped memory for _obs_ensemble_forward_impl.1']
    %12 = vsyncpa [#allocation3], 0
    // Predicated region
    $region2: #{_obs_ensemble_forward_impl.1} parent=1 // pred_check
      _
    $region3: #{_obs_ensemble_forward_impl.1} parent=1 // pred_check_branch
      %14 = sbr.rel (0) target = $region5
    $region4: #{_obs_ensemble_forward_impl.1} parent=1 // pred_region
      _
    $region5: #{_obs_ensemble_forward_impl.1} parent=1 // pred_fallthru
      _
    // Predicated region
    $region6: #{_obs_ensemble_forward_impl.1} parent=1 // pred_check
      _
    $region7: #{_obs_ensemble_forward_impl.1} parent=1 // pred_check_branch
      %16 = sbr.rel (0) target = $region9
    $region8: #{_obs_ensemble_forward_impl.1} parent=1 // pred_region
      _
    $region9: #{_obs_ensemble_forward_impl.1} parent=1 // pred_fallthru
      _
    // Predicated region
    $region10: #{_obs_ensemble_forward_impl.1} parent=1 // pred_check
      _
    $region11: #{_obs_ensemble_forward_impl.1} parent=1 // pred_check_branch
      %18 = sbr.rel (0) target = $region13
    $region12: #{_obs_ensemble_forward_impl.1} parent=1 // pred_region
      _
    $region13: #{_obs_ensemble_forward_impl.1} parent=1 // pred_fallthru
      _
    // Predicated region
    $region14: #{_obs_ensemble_forward_impl.1} parent=1 // pred_check
      _
    $region15: #{_obs_ensemble_forward_impl.1} parent=1 // pred_check_branch
      %20 = sbr.rel (0) target = $region17
    $region16: #{_obs_ensemble_forward_impl.1} parent=1 // pred_region
      _
    $region17: #{_obs_ensemble_forward_impl.1} parent=1 // pred_fallthru
      _
    // Predicated region
    $region18: #{_obs_ensemble_forward_impl.1} parent=1 // pred_check
      _
    $region19: #{_obs_ensemble_forward_impl.1} parent=1 // pred_check_branch
      %22 = sbr.rel (0) target = $region21
    $region20: #{_obs_ensemble_forward_impl.1} parent=1 // pred_region
      _
    $region21: #{_obs_ensemble_forward_impl.1} parent=1 // pred_fallthru
      _
    // Predicated region
    $region22: #{_obs_ensemble_forward_impl.1} parent=1 // pred_check
      _
    $region23: #{_obs_ensemble_forward_impl.1} parent=1 // pred_check_branch
      %24 = sbr.rel (0) target = $region25
    $region24: #{_obs_ensemble_forward_impl.1} parent=1 // pred_region
      _
    $region25: #{_obs_ensemble_forward_impl.1} parent=1 // pred_fallthru
      _
    // Predicated region
    $region26: #{_obs_ensemble_forward_impl.1} parent=1 // pred_check
      _
    $region27: #{_obs_ensemble_forward_impl.1} parent=1 // pred_check_branch
      %26 = sbr.rel (0) target = $region29
    $region28: #{_obs_ensemble_forward_impl.1} parent=1 // pred_region
      _
    $region29: #{_obs_ensemble_forward_impl.1} parent=1 // pred_fallthru
      _
    %v27 = vld [vmem:[%s0] sm:$0xff]
    %v28 = vld [vmem:[%s0 + $0x8] sm:$0x3f]
    %v29 = vld [vmem:[%s1] sm:$0x3f]
    %v30 = vld [vmem:[%s2] sm:$0x1]
    %v32 = vlaneseq
    %v33 = vshrl.u32 %v32, 7
    %v34 = vsub.s32 0, %v33
    %v35 = vrot.slane %v30, %v34
    %vm37 = vcmask 48128
    %v39 = vsel %vm37, %v27, 0
    %v42 = vsel %vm37, %v28, 0
    %vm44 = vcmask 1045504
    %v46 = vsel %vm44, %v29, 0
    %48 = vmatprep.subr.mxu0 0.0
    %49 = vmatpush1.msra.mxu0 0.0
    %50 = vmatprep.subr.mxu0 0.0
    %51 = vmatpush1.msra.mxu0 0.0
    %52 = vmatprep.subr.mxu0 0.0
    %53 = vmatpush1.msra.mxu0 0.0
    %54 = vmatprep.subr.mxu0 0.0
    %55 = vmatpush1.msra.mxu0 0.0
    %56 = vmatprep.subr.mxu0 0.0
    %57 = vmatpush1.msra.mxu0 0.0
    %58 = vmatprep.subr.mxu0 0.0
    %59 = vmatpush1.msra.mxu0 0.0
    %60 = vmatprep.subr.mxu0 0.0
    %61 = vmatpush1.msra.mxu0 0.0
    %62 = vmatprep.subr.mxu0 0.0
    %63 = vmatpush1.msra.mxu0 0.0
    %64 = vmatprep.subr.mxu0 0.0
    %65 = vmatpush1.msra.mxu0 0.0
    %66 = vmatprep.subr.mxu0 0.0
    %67 = vmatpush1.msra.mxu0 0.0
    %68 = vmatprep.subr.mxu0 0.0
    %69 = vmatpush1.msra.mxu0 0.0
    %70 = vmatprep.subr.mxu0 0.0
    %71 = vmatpush1.msra.mxu0 0.0
    %72 = vmatprep.subr.mxu0 0.0
    %73 = vmatpush1.msra.mxu0 0.0
    %74 = vmatprep.subr.mxu0 0.0
    %75 = vmatpush1.msra.mxu0 0.0
    %76 = vmatprep.subr.mxu0 0.0
    %77 = vmatpush1.msra.mxu0 0.0
    %78 = vmatprep.subr.mxu0 0.0
    %79 = vmatpush1.msra.mxu0 %v46
    %80 = vmatprep.subr.mxu0 0.0
    %81 = vmatpush2.msra.mxu0 0.0
    %82 = vmatprep.subr.mxu0 0.0
    %83 = vmatpush2.msra.mxu0 0.0
    %84 = vmatprep.subr.mxu0 0.0
    %85 = vmatpush2.msra.mxu0 0.0
    %86 = vmatprep.subr.mxu0 0.0
    %87 = vmatpush2.msra.mxu0 0.0
    %88 = vmatprep.subr.mxu0 0.0
    %89 = vmatpush2.msra.mxu0 0.0
    %90 = vmatprep.subr.mxu0 0.0
    %91 = vmatpush2.msra.mxu0 0.0
    %92 = vmatprep.subr.mxu0 0.0
    %93 = vmatpush2.msra.mxu0 0.0
    %94 = vmatprep.subr.mxu0 0.0
    %95 = vmatpush2.msra.mxu0 0.0
    %96 = vmatprep.subr.mxu0 0.0
    %97 = vmatpush2.msra.mxu0 0.0
    %98 = vmatprep.subr.mxu0 0.0
    %99 = vmatpush2.msra.mxu0 0.0
    %100 = vmatprep.subr.mxu0 0.0
    %101 = vmatpush2.msra.mxu0 0.0
    %102 = vmatprep.subr.mxu0 0.0
    %103 = vmatpush2.msra.mxu0 0.0
    %104 = vmatprep.subr.mxu0 0.0
    %105 = vmatpush2.msra.mxu0 0.0
    %106 = vmatprep.subr.mxu0 0.0
    %107 = vmatpush2.msra.mxu0 0.0
    %108 = vmatprep.subr.mxu0 0.0
    %109 = vmatpush2.msra.mxu0 0.0
    %110 = vmatprep.subr.mxu0 0.0
    %111 = vmatpush2.msra.mxu0 0.0
    %112 = vmatprep.mubr.f32.mxu0 0.0
    %113 = vmatmul.mubr.f32.gmra.mxu0 %v39
    %v114 = vpop.f32.mrf.mxu0
    %v115 = vadd.f32 %v35, %v114
    %v116 = vpop.f32.mrf.mxu0
    %117 = vmatprep.mubr.f32.mxu0 0.0
    %118 = vmatmul.mubr.f32.gmra.mxu0 %v42
    %v119 = vpop.f32.mrf.mxu0
    %v120 = vadd.f32 %v35, %v119
    %v121 = vpop.f32.mrf.mxu0
    %122 = vdwg.mxu0
    %v123 = vld [vmem:[%s6] sm:$0x3]
    %v124 = vld [vmem:[%s5] sm:$0xff]
    %vm125 = vcmask 64512
    %v127 = vsel %vm125, %v123, 0
    %129 = vmatprep.subr.mxu0 0.0
    %130 = vmatpush1.msra.mxu0 0.0
    %131 = vmatprep.subr.mxu0 0.0
    %132 = vmatpush1.msra.mxu0 0.0
    %133 = vmatprep.subr.mxu0 0.0
    %134 = vmatpush1.msra.mxu0 0.0
    %135 = vmatprep.subr.mxu0 0.0
    %136 = vmatpush1.msra.mxu0 0.0
    %137 = vmatprep.subr.mxu0 0.0
    %138 = vmatpush1.msra.mxu0 0.0
    %139 = vmatprep.subr.mxu0 0.0
    %140 = vmatpush1.msra.mxu0 0.0
    %141 = vmatprep.subr.mxu0 0.0
    %142 = vmatpush1.msra.mxu0 0.0
    %143 = vmatprep.subr.mxu0 0.0
    %144 = vmatpush1.msra.mxu0 0.0
    %145 = vmatprep.subr.mxu0 0.0
    %146 = vmatpush1.msra.mxu0 0.0
    %147 = vmatprep.subr.mxu0 0.0
    %148 = vmatpush1.msra.mxu0 0.0
    %149 = vmatprep.subr.mxu0 0.0
    %150 = vmatpush1.msra.mxu0 0.0
    %151 = vmatprep.subr.mxu0 0.0
    %152 = vmatpush1.msra.mxu0 0.0
    %153 = vmatprep.subr.mxu0 0.0
    %154 = vmatpush1.msra.mxu0 0.0
    %155 = vmatprep.subr.mxu0 0.0
    %156 = vmatpush1.msra.mxu0 0.0
    %157 = vmatprep.subr.mxu0 0.0
    %158 = vmatpush1.msra.mxu0 0.0
    %159 = vmatprep.subr.mxu0 0.0
    %160 = vmatpush1.msra.mxu0 %v124
    %161 = vmatprep.subr.mxu0 0.0
    %162 = vmatpush2.msra.mxu0 0.0
    %163 = vmatprep.subr.mxu0 0.0
    %164 = vmatpush2.msra.mxu0 0.0
    %165 = vmatprep.subr.mxu0 0.0
    %166 = vmatpush2.msra.mxu0 0.0
    %167 = vmatprep.subr.mxu0 0.0
    %168 = vmatpush2.msra.mxu0 0.0
    %169 = vmatprep.subr.mxu0 0.0
    %170 = vmatpush2.msra.mxu0 0.0
    %171 = vmatprep.subr.mxu0 0.0
    %172 = vmatpush2.msra.mxu0 0.0
    %173 = vmatprep.subr.mxu0 0.0
    %174 = vmatpush2.msra.mxu0 0.0
    %175 = vmatprep.subr.mxu0 0.0
    %176 = vmatpush2.msra.mxu0 0.0
    %177 = vmatprep.subr.mxu0 0.0
    %178 = vmatpush2.msra.mxu0 0.0
    %179 = vmatprep.subr.mxu0 0.0
    %180 = vmatpush2.msra.mxu0 0.0
    %181 = vmatprep.subr.mxu0 0.0
    %182 = vmatpush2.msra.mxu0 0.0
    %183 = vmatprep.subr.mxu0 0.0
    %184 = vmatpush2.msra.mxu0 0.0
    %185 = vmatprep.subr.mxu0 0.0
    %186 = vmatpush2.msra.mxu0 0.0
    %187 = vmatprep.subr.mxu0 0.0
    %188 = vmatpush2.msra.mxu0 0.0
    %189 = vmatprep.subr.mxu0 0.0
    %190 = vmatpush2.msra.mxu0 0.0
    %191 = vmatprep.subr.mxu0 0.0
    %192 = vmatpush2.msra.mxu0 0.0
    %193 = vmatprep.mubr.f32.mxu0 0.0
    %194 = vmatmul.mubr.f32.gmra.mxu0 %v127
    %v195 = vpop.f32.mrf.mxu0
    %v196 = vadd.f32 0.0, %v195
    %v197 = vpop.f32.mrf.mxu0
    %198 = vdwg.mxu0
    %v199 = vld [vmem:[%s3] sm:$0xf]
    %v200 = vld [vmem:[%s4] sm:$0x1]
    %v202 = vlaneseq
    %v203 = vshrl.u32 %v202, 7
    %v204 = vsub.s32 0, %v203
    %v205 = vrot.slane %v200, %v204
    %v207 = vlaneseq
    %v208 = vshrl.u32 %v207, 7
    %v209 = vsub.s32 0, %v208
    %v210 = vrot.slane %v199, %v209
    %v211 = vmul.f32 %v210, 0.0
    %v212 = vadd.f32 %v205, %v211
    %v213 = vlaneseq
    %v214 = vshrl.u32 %v213, 7
    %v215 = vsub.s32 1, %v214
    %v216 = vrot.slane %v199, %v215
    %v217 = vmul.f32 %v216, 0.0
    %v218 = vadd.f32 %v212, %v217
    %v219 = vlaneseq
    %v220 = vshrl.u32 %v219, 7
    %v221 = vsub.s32 2, %v220
    %v222 = vrot.slane %v199, %v221
    %v223 = vmul.f32 %v222, 0.0
    %v224 = vadd.f32 %v218, %v223
    %v225 = vlaneseq
    %v226 = vshrl.u32 %v225, 7
    %v227 = vsub.s32 3, %v226
    %v228 = vrot.slane %v199, %v227
    %v229 = vmul.f32 %v228, 0.0
    %v230 = vadd.f32 %v224, %v229
    %v231 = vadd.f32 %v115, %v230
    %v232 = vxor.u32 %v231, 2147483648
    %v233 = vmul.f32 %v232, 1.442695
    %v234 = vpow.pop %v233
    %v235 = vadd.f32 %v234, 1.0
    %v236 = vrcp.pop %v235
    %v237 = vmul.f32 1.0, %v236
    %239 = vrot.lane.b32.xlu0 %v230, 120
    %v240 = vpop.permute.xlu0 %239
    %v242 = vmul.f32 %v237, %v240
    %244 = vrot.lane.b32.xlu0 %v242, 8
    %v245 = vpop.permute.xlu0 %244
    %v247 = vadd.f32 %v115, %v245
    %v248 = vtanh.pop %v247
    %v249 = vsub.f32 1.0, %v237
    %251 = vrot.lane.b32.xlu0 %v248, 124
    %v252 = vpop.permute.xlu0 %251
    %v254 = vmul.f32 %v249, %v252
    %v255 = vmul.f32 %v237, 0.0
    %v256 = vadd.f32 %v254, %v255
    %258 = vset.pattern.permute.xlu0 4
    %259 = vperm.xlu0 %258, %v256
    %v260 = vpop.permute.xlu0 %259
    %v262 = vmul.f32 %v260, %v210
    %v263 = vadd.f32 %v205, %v262
    %264 = vset.pattern.permute.xlu0 5
    %265 = vperm.xlu0 %264, %v256
    %v266 = vpop.permute.xlu0 %265
    %v268 = vmul.f32 %v266, %v216
    %v269 = vadd.f32 %v263, %v268
    %270 = vset.pattern.permute.xlu0 6
    %271 = vperm.xlu0 %270, %v256
    %v272 = vpop.permute.xlu0 %271
    %v274 = vmul.f32 %v272, %v222
    %v275 = vadd.f32 %v269, %v274
    %276 = vset.pattern.permute.xlu0 7
    %277 = vperm.xlu0 %276, %v256
    %v278 = vpop.permute.xlu0 %277
    %v280 = vmul.f32 %v278, %v228
    %v281 = vadd.f32 %v275, %v280
    %v283 = vrot.slane %v281, 6
    %v285 = vadd.f32 %v115, %v283
    %v286 = vxor.u32 %v285, 2147483648
    %v287 = vmul.f32 %v286, 1.442695
    %v288 = vpow.pop %v287
    %v289 = vadd.f32 %v288, 1.0
    %v290 = vrcp.pop %v289
    %v291 = vmul.f32 1.0, %v290
    %292 = vrot.lane.b32.xlu0 %v283, 120
    %v293 = vpop.permute.xlu0 %292
    %v295 = vmul.f32 %v291, %v293
    %297 = vrot.lane.b32.xlu0 %v295, 8
    %v298 = vpop.permute.xlu0 %297
    %v300 = vadd.f32 %v115, %v298
    %v301 = vtanh.pop %v300
    %v302 = vsub.f32 1.0, %v291
    %304 = vrot.lane.b32.xlu0 %v301, 124
    %v305 = vpop.permute.xlu0 %304
    %v307 = vmul.f32 %v302, %v305
    %v308 = vrot.slane %v256, 6
    %v310 = vmul.f32 %v291, %v308
    %v311 = vadd.f32 %v307, %v310
    %313 = vset.pattern.permute.xlu0 4
    %314 = vperm.xlu0 %313, %v311
    %v315 = vpop.permute.xlu0 %314
    %v317 = vmul.f32 %v315, %v210
    %v318 = vadd.f32 %v205, %v317
    %319 = vset.pattern.permute.xlu0 5
    %320 = vperm.xlu0 %319, %v311
    %v321 = vpop.permute.xlu0 %320
    %v323 = vmul.f32 %v321, %v216
    %v324 = vadd.f32 %v318, %v323
    %325 = vset.pattern.permute.xlu0 6
    %326 = vperm.xlu0 %325, %v311
    %v327 = vpop.permute.xlu0 %326
    %v329 = vmul.f32 %v327, %v222
    %v330 = vadd.f32 %v324, %v329
    %331 = vset.pattern.permute.xlu0 7
    %332 = vperm.xlu0 %331, %v311
    %v333 = vpop.permute.xlu0 %332
    %v335 = vmul.f32 %v333, %v228
    %v336 = vadd.f32 %v330, %v335
    %v338 = vrot.slane %v336, 6
    %v340 = vadd.f32 %v115, %v338
    %v341 = vxor.u32 %v340, 2147483648
    %v342 = vmul.f32 %v341, 1.442695
    %v343 = vpow.pop %v342
    %v344 = vadd.f32 %v343, 1.0
    %v345 = vrcp.pop %v344
    %v346 = vmul.f32 1.0, %v345
    %347 = vrot.lane.b32.xlu0 %v338, 120
    %v348 = vpop.permute.xlu0 %347
    %v350 = vmul.f32 %v346, %v348
    %352 = vrot.lane.b32.xlu0 %v350, 8
    %v353 = vpop.permute.xlu0 %352
    %v355 = vadd.f32 %v115, %v353
    %v356 = vtanh.pop %v355
    %v357 = vsub.f32 1.0, %v346
    %359 = vrot.lane.b32.xlu0 %v356, 124
    %v360 = vpop.permute.xlu0 %359
    %v362 = vmul.f32 %v357, %v360
    %v363 = vrot.slane %v311, 6
    %v365 = vmul.f32 %v346, %v363
    %v366 = vadd.f32 %v362, %v365
    %368 = vset.pattern.permute.xlu0 4
    %369 = vperm.xlu0 %368, %v366
    %v370 = vpop.permute.xlu0 %369
    %v372 = vmul.f32 %v370, %v210
    %v373 = vadd.f32 %v205, %v372
    %374 = vset.pattern.permute.xlu0 5
    %375 = vperm.xlu0 %374, %v366
    %v376 = vpop.permute.xlu0 %375
    %v378 = vmul.f32 %v376, %v216
    %v379 = vadd.f32 %v373, %v378
    %380 = vset.pattern.permute.xlu0 6
    %381 = vperm.xlu0 %380, %v366
    %v382 = vpop.permute.xlu0 %381
    %v384 = vmul.f32 %v382, %v222
    %v385 = vadd.f32 %v379, %v384
    %386 = vset.pattern.permute.xlu0 7
    %387 = vperm.xlu0 %386, %v366
    %v388 = vpop.permute.xlu0 %387
    %v390 = vmul.f32 %v388, %v228
    %v391 = vadd.f32 %v385, %v390
    %v393 = vrot.slane %v391, 6
    %v395 = vadd.f32 %v115, %v393
    %v396 = vxor.u32 %v395, 2147483648
    %v397 = vmul.f32 %v396, 1.442695
    %v398 = vpow.pop %v397
    %v399 = vadd.f32 %v398, 1.0
    %v400 = vrcp.pop %v399
    %v401 = vmul.f32 1.0, %v400
    %402 = vrot.lane.b32.xlu0 %v393, 120
    %v403 = vpop.permute.xlu0 %402
    %v405 = vmul.f32 %v401, %v403
    %407 = vrot.lane.b32.xlu0 %v405, 8
    %v408 = vpop.permute.xlu0 %407
    %v410 = vadd.f32 %v115, %v408
    %v411 = vtanh.pop %v410
    %v412 = vsub.f32 1.0, %v401
    %414 = vrot.lane.b32.xlu0 %v411, 124
    %v415 = vpop.permute.xlu0 %414
    %v417 = vmul.f32 %v412, %v415
    %v418 = vrot.slane %v366, 6
    %v420 = vmul.f32 %v401, %v418
    %v421 = vadd.f32 %v417, %v420
    %423 = vset.pattern.permute.xlu0 4
    %424 = vperm.xlu0 %423, %v421
    %v425 = vpop.permute.xlu0 %424
    %v427 = vmul.f32 %v425, %v210
    %v428 = vadd.f32 %v205, %v427
    %429 = vset.pattern.permute.xlu0 5
    %430 = vperm.xlu0 %429, %v421
    %v431 = vpop.permute.xlu0 %430
    %v433 = vmul.f32 %v431, %v216
    %v434 = vadd.f32 %v428, %v433
    %435 = vset.pattern.permute.xlu0 6
    %436 = vperm.xlu0 %435, %v421
    %v437 = vpop.permute.xlu0 %436
    %v439 = vmul.f32 %v437, %v222
    %v440 = vadd.f32 %v434, %v439
    %441 = vset.pattern.permute.xlu0 7
    %442 = vperm.xlu0 %441, %v421
    %v443 = vpop.permute.xlu0 %442
    %v445 = vmul.f32 %v443, %v228
    %v446 = vadd.f32 %v440, %v445
    %v448 = vrot.slane %v446, 6
    %v450 = vadd.f32 %v120, %v448
    %v451 = vxor.u32 %v450, 2147483648
    %v452 = vmul.f32 %v451, 1.442695
    %v453 = vpow.pop %v452
    %v454 = vadd.f32 %v453, 1.0
    %v455 = vrcp.pop %v454
    %v456 = vmul.f32 1.0, %v455
    %457 = vrot.lane.b32.xlu0 %v448, 120
    %v458 = vpop.permute.xlu0 %457
    %v460 = vmul.f32 %v456, %v458
    %462 = vrot.lane.b32.xlu0 %v460, 8
    %v463 = vpop.permute.xlu0 %462
    %v465 = vadd.f32 %v120, %v463
    %v466 = vtanh.pop %v465
    %v467 = vsub.f32 1.0, %v456
    %469 = vrot.lane.b32.xlu0 %v466, 124
    %v470 = vpop.permute.xlu0 %469
    %v472 = vmul.f32 %v467, %v470
    %v473 = vrot.slane %v421, 6
    %v475 = vmul.f32 %v456, %v473
    %v476 = vadd.f32 %v472, %v475
    %478 = vset.pattern.permute.xlu0 4
    %479 = vperm.xlu0 %478, %v476
    %v480 = vpop.permute.xlu0 %479
    %v482 = vmul.f32 %v480, %v210
    %v483 = vadd.f32 %v205, %v482
    %484 = vset.pattern.permute.xlu0 5
    %485 = vperm.xlu0 %484, %v476
    %v486 = vpop.permute.xlu0 %485
    %v488 = vmul.f32 %v486, %v216
    %v489 = vadd.f32 %v483, %v488
    %490 = vset.pattern.permute.xlu0 6
    %491 = vperm.xlu0 %490, %v476
    %v492 = vpop.permute.xlu0 %491
    %v494 = vmul.f32 %v492, %v222
    %v495 = vadd.f32 %v489, %v494
    %496 = vset.pattern.permute.xlu0 7
    %497 = vperm.xlu0 %496, %v476
    %v498 = vpop.permute.xlu0 %497
    %v500 = vmul.f32 %v498, %v228
    %v501 = vadd.f32 %v495, %v500
    %v503 = vrot.slane %v501, 6
    %v505 = vadd.f32 %v120, %v503
    %v506 = vxor.u32 %v505, 2147483648
    %v507 = vmul.f32 %v506, 1.442695
    %v508 = vpow.pop %v507
    %v509 = vadd.f32 %v508, 1.0
    %v510 = vrcp.pop %v509
    %v511 = vmul.f32 1.0, %v510
    %512 = vrot.lane.b32.xlu0 %v503, 120
    %v513 = vpop.permute.xlu0 %512
    %v515 = vmul.f32 %v511, %v513
    %517 = vrot.lane.b32.xlu0 %v515, 8
    %v518 = vpop.permute.xlu0 %517
    %v520 = vadd.f32 %v120, %v518
    %v521 = vtanh.pop %v520
    %v522 = vsub.f32 1.0, %v511
    %524 = vrot.lane.b32.xlu0 %v521, 124
    %v525 = vpop.permute.xlu0 %524
    %v527 = vmul.f32 %v522, %v525
    %v528 = vrot.slane %v476, 6
    %v530 = vmul.f32 %v511, %v528
    %v531 = vadd.f32 %v527, %v530
    %533 = vset.pattern.permute.xlu0 4
    %534 = vperm.xlu0 %533, %v531
    %v535 = vpop.permute.xlu0 %534
    %v537 = vmul.f32 %v535, %v210
    %v538 = vadd.f32 %v205, %v537
    %539 = vset.pattern.permute.xlu0 5
    %540 = vperm.xlu0 %539, %v531
    %v541 = vpop.permute.xlu0 %540
    %v543 = vmul.f32 %v541, %v216
    %v544 = vadd.f32 %v538, %v543
    %545 = vset.pattern.permute.xlu0 6
    %546 = vperm.xlu0 %545, %v531
    %v547 = vpop.permute.xlu0 %546
    %v549 = vmul.f32 %v547, %v222
    %v550 = vadd.f32 %v544, %v549
    %551 = vset.pattern.permute.xlu0 7
    %552 = vperm.xlu0 %551, %v531
    %v553 = vpop.permute.xlu0 %552
    %v555 = vmul.f32 %v553, %v228
    %v556 = vadd.f32 %v550, %v555
    %v558 = vrot.slane %v556, 6
    %v560 = vadd.f32 %v120, %v558
    %v561 = vxor.u32 %v560, 2147483648
    %v562 = vmul.f32 %v561, 1.442695
    %v563 = vpow.pop %v562
    %v564 = vadd.f32 %v563, 1.0
    %v565 = vrcp.pop %v564
    %v566 = vmul.f32 1.0, %v565
    %567 = vrot.lane.b32.xlu0 %v558, 120
    %v568 = vpop.permute.xlu0 %567
    %v570 = vmul.f32 %v566, %v568
    %572 = vrot.lane.b32.xlu0 %v570, 8
    %v573 = vpop.permute.xlu0 %572
    %v575 = vadd.f32 %v120, %v573
    %v576 = vtanh.pop %v575
    %v577 = vsub.f32 1.0, %v566
    %579 = vrot.lane.b32.xlu0 %v576, 124
    %v580 = vpop.permute.xlu0 %579
    %v582 = vmul.f32 %v577, %v580
    %v583 = vrot.slane %v531, 6
    %v585 = vmul.f32 %v566, %v583
    %v586 = vadd.f32 %v582, %v585
    %vm587 = vcmask 62500
    %v588 = vsel %vm587, %v586, -inf
    %589 = vmax.xlane.f32.xlu0 %v588
    %v590 = vpop.xlane.xlu0 %589
    %v591 = vsub.f32 %v586, %v590
    %v592 = vmul.f32 %v591, 1.442695
    %v593 = vpow.pop %v592
    %595 = vrot.lane.b32.xlu0 %v593, 124
    %v596 = vpop.permute.xlu0 %595
    %vm598 = vcmask 29700
    %v599 = vsel %vm598, %v596, 0.0
    %600 = vadd.xlane.f32.xlu0 %v599
    %v601 = vpop.xlane.xlu0 %600
    %v602 = vrcp.pop %v601
    %v603 = vmul.f32 %v593, %v602
    %605 = vset.pattern.permute.xlu0 4
    %606 = vperm.xlu0 %605, %v603
    %v607 = vpop.permute.xlu0 %606
    %v610 = vrot.slane %v196, 4
    %v612 = vmul.f32 %v607, %v610
    %613 = vset.pattern.permute.xlu0 5
    %614 = vperm.xlu0 %613, %v603
    %v615 = vpop.permute.xlu0 %614
    %617 = vrot.lane.b32.xlu0 %v610, 122
    %v618 = vpop.permute.xlu0 %617
    %v620 = vmul.f32 %v615, %v618
    %v621 = vadd.f32 %v612, %v620
    %622 = vset.pattern.permute.xlu0 6
    %623 = vperm.xlu0 %622, %v603
    %v624 = vpop.permute.xlu0 %623
    %626 = vrot.lane.b32.xlu0 %v610, 116
    %v627 = vpop.permute.xlu0 %626
    %v629 = vmul.f32 %v624, %v627
    %v630 = vadd.f32 %v621, %v629
    %631 = vset.pattern.permute.xlu0 7
    %632 = vperm.xlu0 %631, %v603
    %v633 = vpop.permute.xlu0 %632
    %635 = vrot.lane.b32.xlu0 %v610, 110
    %v636 = vpop.permute.xlu0 %635
    %v638 = vmul.f32 %v633, %v636
    %v639 = vadd.f32 %v630, %v638
    %vm640 = vcmask 46084
    %641 = vst.msk [vmem:[#allocation2 - $0x4] sm:$0x30] %vm640, %v639
    // Predicated region
    $region30: #{_obs_ensemble_forward_impl.1} parent=1 // pred_check
      _
    $region31: #{_obs_ensemble_forward_impl.1} parent=1 // pred_check_branch
      %643 = sbr.rel (0) target = $region33
    $region32: #{_obs_ensemble_forward_impl.1} parent=1 // pred_region
      %s645 = ssub.s32 32, 32
      %646 = vsyncadd [#allocation3], %s645
      %s648 = sshll.u32 [#allocation2], 4
      %s649 = int_to_ptr.vmem [resolvable:$true] %s648
      %651 = dma.vmem_to_hbm [thread:$0]  %s649, 32, %s7, [#allocation3]
    $region33: #{_obs_ensemble_forward_impl.1} parent=1 // pred_fallthru
      _
    // Predicated region
    $region34: #{_obs_ensemble_forward_impl.1} parent=1 // pred_check
      _
    $region35: #{_obs_ensemble_forward_impl.1} parent=1 // pred_check_branch
      %653 = sbr.rel (0) target = $region37
    $region36: #{_obs_ensemble_forward_impl.1} parent=1 // pred_region
      %654 = dma.done [#allocation3], 32
    $region37: #{_obs_ensemble_forward_impl.1} parent=1 // pred_fallthru
      _
    %655 = vsyncpa [#allocation3], 1

</llo_original>
